<compile_context>
chip_gen: v5e
topology: v5e:2x2
jax: 0.10.0
libtpu: 0.0.40
codegen_flags: <defaults>
</compile_context>

<pallas_src>
import math

import jax
import jax.numpy as jnp
from jax.experimental import pallas as pl
from jax.experimental.pallas import tpu as pltpu


def _round_up(v: int, m: int) -> int:
    return (v + m - 1) // m * m


def _vmem_budget_bytes() -> int:
    """VMEM budget with headroom: ~75% of physical, clamped to [32, 100] MiB."""
    try:
        cap = int(pltpu.get_tpu_info().vmem_capacity_bytes)
    except Exception:
        cap = 64 * 1024 * 1024  # conservative (v7x-sized) fallback
    return max(32 * 1024 * 1024, min(cap * 3 // 4, 100 * 1024 * 1024))


def _encoder_kernel_fused(x_ref, w_ref, b_ref, o_ref):
    """Whole-K tile resident: one matmul + bias + ReLU, no accumulator."""
    y = jnp.dot(x_ref[...], w_ref[...], preferred_element_type=jnp.float32)
    y = y + b_ref[...].astype(jnp.float32)
    o_ref[...] = jnp.maximum(y, 0.0).astype(o_ref.dtype)


def _encoder_kernel_tiled(x_ref, w_ref, b_ref, o_ref, acc_ref):
    """(bm, bn) output tile accumulated over the (innermost) K grid axis."""
    k = pl.program_id(2)

    @pl.when(k == 0)
    def _init():
        acc_ref[...] = jnp.zeros_like(acc_ref)

    acc_ref[...] += jnp.dot(x_ref[...], w_ref[...],
                            preferred_element_type=jnp.float32)

    @pl.when(k == pl.num_programs(2) - 1)
    def _finalize():
        y = acc_ref[...] + b_ref[...].astype(jnp.float32)
        o_ref[...] = jnp.maximum(y, 0.0).astype(o_ref.dtype)


def encoder_forward(x, w, b, *, tm=512, tk=1024, tn=1024, mxu_dtype=None,
                    vmem_budget=None, force_tiled=False):
    """relu(x @ w + b) via Pallas.

    mxu_dtype: optional narrower dtype (e.g. jnp.bfloat16) for MXU inputs;
    halves streamed weight bytes while accumulation / bias / ReLU stay f32.
    """
    B, K = x.shape
    Kw, N = w.shape
    assert K == Kw and b.shape == (N,)

    out_dtype = x.dtype
    if vmem_budget is None:
        vmem_budget = _vmem_budget_bytes()

    if mxu_dtype is not None:
        # Pre-cast once in HBM so the DMA'd operand bytes shrink too.
        x = x.astype(mxu_dtype)
        w = w.astype(mxu_dtype)
    in_sz = x.dtype.itemsize
    b2 = b.reshape(1, N)
    b_sz = b2.dtype.itemsize

    # Align requested tiles to the (8, 128) hardware tile.
    tm = max(8, tm - tm % 8)
    tk = max(128, tk - tk % 128)
    tn = max(128, tn - tn % 128)

    def footprint(bm_, bk_, bn_, k_steps):
        acc = bm_ * bn_ * 4 if k_steps > 1 else 0
        return (2 * bm_ * bk_ * in_sz        # x, double-buffered
                + 2 * bk_ * bn_ * in_sz      # w, double-buffered (upper bound)
                + 2 * bm_ * bn_ * 4          # out, double-buffered
                + 2 * bn_ * b_sz             # bias
                + acc)

    # ------------------------------------------------------------------
    # Path 1: weight-resident fused kernel (the common encoder case).
    # ------------------------------------------------------------------
    bm = B if B <= tm else tm
    if not force_tiled and footprint(bm, K, N, 1) <= vmem_budget:
        # Megacore occupancy (v7x): prefer >= 2 parallel batch tiles.
        while pl.cdiv(B, bm) < 2 and bm > 8 and B > 8:
            bm = max(8, _round_up(bm // 2, 8))
        return pl.pallas_call(
            _encoder_kernel_fused,
            out_shape=jax.ShapeDtypeStruct((B, N), out_dtype),
            grid=(pl.cdiv(B, bm),),
            in_specs=[
                pl.BlockSpec((bm, K), lambda i: (i, 0)),
                pl.BlockSpec((K, N), lambda i: (0, 0)),  # constant -> one DMA
                pl.BlockSpec((1, N), lambda i: (0, 0)),
            ],
            out_specs=pl.BlockSpec((bm, N), lambda i: (i, 0)),
            compiler_params=pltpu.CompilerParams(
                dimension_semantics=("parallel",),
                vmem_limit_bytes=vmem_budget,
            ),
        )(x, w, b2)

    # ------------------------------------------------------------------
    # Paths 2/3: weight does not fit -> tile N (and K if needed).
    # ------------------------------------------------------------------
    bm = B if B <= tm else tm
    bn = N if N <= tn else tn
    bk = K if K <= tk else tk

    k_steps = pl.cdiv(K, bk)
    while footprint(bm, bk, bn, k_steps) > vmem_budget and (
            bk > 128 or bn > 128 or bm > 8):
        if bk > 128:
            bk = max(128, _round_up(bk // 2, 128))
        elif bn > 128:
            bn = max(128, _round_up(bn // 2, 128))
        else:
            bm = max(8, _round_up(bm // 2, 8))
        k_steps = pl.cdiv(K, bk)

    if k_steps > 1 and K % bk != 0:
        # Only the contraction axis needs zero padding (tail must contribute 0).
        Kp = _round_up(K, bk)
        x = jnp.pad(x, ((0, 0), (0, Kp - K)))
        w = jnp.pad(w, ((0, Kp - K), (0, 0)))
        K = Kp
        k_steps = K // bk

    gi, gj = pl.cdiv(B, bm), pl.cdiv(N, bn)

    if k_steps == 1:
        # Path 2: K fits in one tile. j-outer / i-inner so each weight
        # column-block is fetched exactly once; the (small) x re-streams.
        return pl.pallas_call(
            _encoder_kernel_fused,
            out_shape=jax.ShapeDtypeStruct((B, N), out_dtype),
            grid=(gj, gi),
            in_specs=[
                pl.BlockSpec((bm, K), lambda j, i: (i, 0)),
                pl.BlockSpec((K, bn), lambda j, i: (0, j)),
                pl.BlockSpec((1, bn), lambda j, i: (0, j)),
            ],
            out_specs=pl.BlockSpec((bm, bn), lambda j, i: (i, j)),
            compiler_params=pltpu.CompilerParams(
                dimension_semantics=("parallel", "parallel"),
                vmem_limit_bytes=vmem_budget,
            ),
        )(x, w, b2)

    # Path 3: full 3-D grid, f32 accumulator, K innermost.
    return pl.pallas_call(
        _encoder_kernel_tiled,
        out_shape=jax.ShapeDtypeStruct((B, N), out_dtype),
        grid=(gi, gj, k_steps),
        in_specs=[
            pl.BlockSpec((bm, bk), lambda i, j, k: (i, k)),
            pl.BlockSpec((bk, bn), lambda i, j, k: (k, j)),
            pl.BlockSpec((1, bn), lambda i, j, k: (0, j)),
        ],
        out_specs=pl.BlockSpec((bm, bn), lambda i, j, k: (i, j)),
        scratch_shapes=[pltpu.VMEM((bm, bn), jnp.float32)],
        compiler_params=pltpu.CompilerParams(
            dimension_semantics=("parallel", "parallel", "arbitrary"),
            vmem_limit_bytes=vmem_budget,
        ),
    )(x, w, b2)


def _ref(x, w, b):
    return jnp.maximum(x @ w + b, 0.0)


if __name__ == "__main__":
    key = jax.random.PRNGKey(0)

    # --- Test 1: module-sized shapes: Encoder(in_dim=16, hidsz=32), batch=8.
    #     Hits the weight-resident fused path.
    B, in_dim, hidsz = 8, 16, 32
    kx, kw, kb, key = jax.random.split(key, 4)
    bound = 1.0 / math.sqrt(in_dim)
    w = jax.random.uniform(kw, (in_dim, hidsz), jnp.float32, -bound, bound)
    b = jax.random.uniform(kb, (hidsz,), jnp.float32, -bound, bound)
    x = jax.random.normal(kx, (B, in_dim), jnp.float32)

    out = encoder_forward(x, w, b)
    jax.block_until_ready(out)
    assert out.shape == (B, hidsz)
    assert jnp.allclose(out, _ref(x, w, b), atol=1e-5, rtol=1e-5)

    # --- Test 2: force the 3-D tiled/accumulating path (grid (3, 3, 2)).
    B2, K2, N2 = 24, 256, 384
    kx2, kw2, kb2, key = jax.random.split(key, 4)
    bound2 = 1.0 / math.sqrt(K2)
    w2 = jax.random.uniform(kw2, (K2, N2), jnp.float32, -bound2, bound2)
    b2 = jax.random.uniform(kb2, (N2,), jnp.float32, -bound2, bound2)
    x2 = jax.random.normal(kx2, (B2, K2), jnp.float32)

    out2 = encoder_forward(x2, w2, b2, tm=8, tk=128, tn=128, force_tiled=True)
    jax.block_until_ready(out2)
    assert out2.shape == (B2, N2)
    assert jnp.allclose(out2, _ref(x2, w2, b2), atol=1e-4, rtol=1e-4)

    # --- Test 3: force the 2-D weight-column-resident fallback (grid (3, 3)).
    out3 = encoder_forward(x2, w2, b2, tm=8, tk=256, tn=128, force_tiled=True)
    jax.block_until_ready(out3)
    assert jnp.allclose(out3, _ref(x2, w2, b2), atol=1e-4, rtol=1e-4)

    # --- Test 4: bf16 MXU path (f32 accumulation), relaxed tolerances.
    out4 = encoder_forward(x, w, b, mxu_dtype=jnp.bfloat16)
    jax.block_until_ready(out4)
    assert jnp.allclose(out4, _ref(x, w, b), atol=3e-2, rtol=3e-2)

    print("KERNEL_OK")
</pallas_src>

<mosaic_0001>
module attributes {stable_mosaic.version = 11 : i64} {
  func.func @_encoder_kernel_fused(%arg0: i32, %arg1: memref<8x16xf32, #tpu.memory_space<vmem>>, %arg2: memref<16x32xf32, #tpu.memory_space<vmem>>, %arg3: memref<1x32xf32, #tpu.memory_space<vmem>>, %arg4: memref<8x32xf32, #tpu.memory_space<vmem>>) attributes {dimension_semantics = [#tpu.dimension_semantics<parallel>], iteration_bounds = array<i64: 1>, scalar_prefetch = 0 : i64, scratch_operands = 0 : i64, tpu.core_type = #tpu.core_type<tc>, window_params = [{transform_indices = @transform_0, window_bounds = array<i64: 8, 16>}, {pipeline_mode = #tpu.pipeline_mode<synchronous>, transform_indices = @transform_1, window_bounds = array<i64: 16, 32>}, {pipeline_mode = #tpu.pipeline_mode<synchronous>, transform_indices = @transform_2, window_bounds = array<i64: 1, 32>}, {transform_indices = @transform_3, window_bounds = array<i64: 8, 32>}]} {
    %c0 = arith.constant 0 : index
    %c0_0 = arith.constant 0 : index
    %0 = vector.load %arg1[%c0, %c0_0] : memref<8x16xf32, #tpu.memory_space<vmem>>, vector<8x16xf32>
    %c0_1 = arith.constant 0 : index
    %c0_2 = arith.constant 0 : index
    %1 = vector.load %arg2[%c0_1, %c0_2] : memref<16x32xf32, #tpu.memory_space<vmem>>, vector<16x32xf32>
    %cst = arith.constant dense<0.000000e+00> : vector<8x32xf32>
    %2 = tpu.matmul %0, %1, %cst {dimension_numbers = #tpu.dot_dimension_numbers<[1], [0], [0], [1], [0, 0, 1, 1], [], []>} : vector<8x16xf32>, vector<16x32xf32>, vector<8x32xf32> -> vector<8x32xf32>
    %c0_3 = arith.constant 0 : index
    %c0_4 = arith.constant 0 : index
    %3 = vector.load %arg3[%c0_3, %c0_4] : memref<1x32xf32, #tpu.memory_space<vmem>>, vector<1x32xf32>
    %4 = vector.broadcast %3 : vector<1x32xf32> to vector<8x32xf32>
    %5 = arith.addf %2, %4 : vector<8x32xf32>
    %cst_5 = arith.constant 0.000000e+00 : f32
    %6 = vector.broadcast %cst_5 : f32 to vector<8x32xf32>
    %7 = arith.maximumf %5, %6 : vector<8x32xf32>
    %c0_6 = arith.constant 0 : index
    %c0_7 = arith.constant 0 : index
    %8 = vector.load %arg4[%c0_6, %c0_7] : memref<8x32xf32, #tpu.memory_space<vmem>>, vector<8x32xf32>
    tpu.vector_store %arg4[%c0_6, %c0_7], %7 {strides = array<i32>} : memref<8x32xf32, #tpu.memory_space<vmem>>, vector<8x32xf32>,
    return
  }
  func.func @transform_0(%arg0: i32) -> (i32, i32) {
    %c0_i32 = arith.constant 0 : i32
    %c0_i32_0 = arith.constant 0 : i32
    return %arg0, %c0_i32 : i32, i32
  }
  func.func @transform_1(%arg0: i32) -> (i32, i32) {
    %c0_i32 = arith.constant 0 : i32
    %c0_i32_0 = arith.constant 0 : i32
    %c0_i32_1 = arith.constant 0 : i32
    return %c0_i32, %c0_i32_0 : i32, i32
  }
  func.func @transform_2(%arg0: i32) -> (i32, i32) {
    %c0_i32 = arith.constant 0 : i32
    %c0_i32_0 = arith.constant 0 : i32
    %c0_i32_1 = arith.constant 0 : i32
    return %c0_i32, %c0_i32_0 : i32, i32
  }
  func.func @transform_3(%arg0: i32) -> (i32, i32) {
    %c0_i32 = arith.constant 0 : i32
    %c0_i32_0 = arith.constant 0 : i32
    return %arg0, %c0_i32 : i32, i32
  }
}

</mosaic_0001>

<llo_original>
// kernel: tpu_custom_call.1
$region0: #{tpu_custom_call.1}
  #allocation0 [shape = 'u32[]', space=smem, size = 0x4, offset = 0x4, fixed_abs, tag = 'smem constant byte address 0x4 - core index']
  #allocation1 [shape = 'u32[72,128]{1,0:T(1,128)}', space=vmem, size = 0x9000, scoped, tag = 'internal scratch']
  %s0 = inlined_call_operand.hbm [shape: f32[8,16], index: 0, kind: input, shape index: {}]
  %s1 = inlined_call_operand.hbm [shape: f32[16,32], index: 1, kind: input, shape index: {}]
  %s2 = inlined_call_operand.vmem [shape: f32[1,32], index: 2, kind: input, shape index: {}]
  %s3 = inlined_call_operand.hbm [shape: f32[8,32], index: 3, kind: output, shape index: {}]
  %s4 = sld [smem:[#allocation0]]
  $region30: #{tpu_custom_call.1} parent=0
    _
  %s6 = ssub.s32 1, %s4
  %s7 = scalar_select 0, %s6, %s4
  $region1: #{tpu_custom_call.1} parent=0
    #allocation2 [shape = 'u8[4096]{0}', space=vmem, size = 0x1000, scoped, tag = 'input window, operand 0, single buffered']
    #allocation3 [shape = 's32[1]{0}', space=sflag, size = 0x4, scoped, tag = 'scoped memory for tpu_custom_call.1']
    #allocation4 [shape = 's32[1]{0}', space=sflag, size = 0x4, scoped, tag = 'scoped memory for tpu_custom_call.1']
    #allocation5 [shape = 'u8[8192]{0}', space=vmem, size = 0x2000, scoped, tag = 'input window, operand 1, single buffered']
    #allocation6 [shape = 's32[1]{0}', space=sflag, size = 0x4, scoped, tag = 'scoped memory for tpu_custom_call.1']
    #allocation7 [shape = 'u8[4096]{0}', space=vmem, size = 0x1000, scoped, tag = 'output window, operand 0, single buffered']
    %8 = vsyncpa [#allocation3], 0
    %9 = vsyncpa [#allocation6], 0
    %10 = vsyncpa [#allocation4], 0
    // Predicated region
    $region2: #{tpu_custom_call.1} parent=1 // pred_check
      _
    $region3: #{tpu_custom_call.1} parent=1 // pred_check_branch
      %12 = sbr.rel (0) target = $region5
    $region4: #{tpu_custom_call.1} parent=1 // pred_region
      %14 = vsyncadd [#allocation3], 0
      %s16 = sshll.u32 %s0, 4
      %s17 = int_to_ptr.hbm [resolvable:$true] %s16
      %s18 = sshll.u32 [#allocation2], 4
      %s19 = int_to_ptr.vmem [resolvable:$true] %s18
      %21 = dma.hbm_to_vmem [thread:$0]  %s17, 128, %s19, [#allocation3]
    $region5: #{tpu_custom_call.1} parent=1 // pred_fallthru
      _
    // Predicated region
    $region6: #{tpu_custom_call.1} parent=1 // pred_check
      _
    $region7: #{tpu_custom_call.1} parent=1 // pred_check_branch
      %23 = sbr.rel (0) target = $region9
    $region8: #{tpu_custom_call.1} parent=1 // pred_region
      %25 = vsyncadd [#allocation6], 0
      %s26 = sshll.u32 %s1, 4
      %s27 = int_to_ptr.hbm [resolvable:$true] %s26
      %s28 = sshll.u32 [#allocation5], 4
      %s29 = int_to_ptr.vmem [resolvable:$true] %s28
      %34 = dma.hbm_to_vmem [thread:$0]  %s27, 256, %s29, [#allocation6], 128, 128, 8
    $region9: #{tpu_custom_call.1} parent=1 // pred_fallthru
      _
    // Predicated region
    $region10: #{tpu_custom_call.1} parent=1 // pred_check
      _
    $region11: #{tpu_custom_call.1} parent=1 // pred_check_branch
      %36 = sbr.rel (0) target = $region13
    $region12: #{tpu_custom_call.1} parent=1 // pred_region
      _
    $region13: #{tpu_custom_call.1} parent=1 // pred_fallthru
      _
    // Predicated region
    $region14: #{tpu_custom_call.1} parent=1 // pred_check
      _
    $region15: #{tpu_custom_call.1} parent=1 // pred_check_branch
      %38 = sbr.rel (0) target = $region17
    $region16: #{tpu_custom_call.1} parent=1 // pred_region
      %40 = dma.done [#allocation3], 128
    $region17: #{tpu_custom_call.1} parent=1 // pred_fallthru
      _
    // Predicated region
    $region18: #{tpu_custom_call.1} parent=1 // pred_check
      _
    $region19: #{tpu_custom_call.1} parent=1 // pred_check_branch
      %42 = sbr.rel (0) target = $region21
    $region20: #{tpu_custom_call.1} parent=1 // pred_region
      %44 = dma.done [#allocation6], 256
    $region21: #{tpu_custom_call.1} parent=1 // pred_fallthru
      _
    %v45 = vld [vmem:[#allocation2] sm:$0xff]
    %v46 = vld [vmem:[#allocation5] sm:$0xff]
    %v47 = vld [vmem:[#allocation5 + $0x8] sm:$0xff]
    %v48 = vld [vmem:[%s2] sm:$0x1]
    %v50 = vperm.slane %v48, 0
    %vm52 = vcmask 130048
    %v54 = vsel %vm52, %v45, 0
    %56 = vmatpush.msra.mxu0 0.0
    %57 = vmatpush.msra.mxu0 0.0
    %58 = vmatpush.msra.mxu0 0.0
    %59 = vmatpush.msra.mxu0 0.0
    %60 = vmatpush.msra.mxu0 0.0
    %61 = vmatpush.msra.mxu0 0.0
    %62 = vmatpush.msra.mxu0 0.0
    %63 = vmatpush.msra.mxu0 0.0
    %64 = vmatpush.msra.mxu0 0.0
    %65 = vmatpush.msra.mxu0 0.0
    %66 = vmatpush.msra.mxu0 0.0
    %67 = vmatpush.msra.mxu0 0.0
    %68 = vmatpush.msra.mxu0 0.0
    %69 = vmatpush.msra.mxu0 0.0
    %70 = vmatpush.msra.mxu0 %v47
    %71 = vmatpush.msra.mxu0 %v46
    %72 = vmatmul.f32.gmra.mxu0 %v54
    %v73 = vpop.f32.mrf.mxu0
    %v74 = vadd.f32 %v50, %v73
    %75 = vdwg.mxu0
    %v76 = vmax.f32 %v74, 0.0
    %vm77 = vcmask 261120
    %78 = vst.msk [vmem:[#allocation7] sm:$0xff] %vm77, %v76
    // Predicated region
    $region22: #{tpu_custom_call.1} parent=1 // pred_check
      _
    $region23: #{tpu_custom_call.1} parent=1 // pred_check_branch
      %80 = sbr.rel (0) target = $region25
    $region24: #{tpu_custom_call.1} parent=1 // pred_region
      %82 = vsyncadd [#allocation4], 0
      %s84 = sshll.u32 [#allocation7], 4
      %s85 = int_to_ptr.vmem [resolvable:$true] %s84
      %s86 = sshll.u32 %s3, 4
      %s87 = int_to_ptr.hbm [resolvable:$true] %s86
      %89 = dma.vmem_to_hbm [thread:$0]  %s85, 128, %s87, [#allocation4]
    $region25: #{tpu_custom_call.1} parent=1 // pred_fallthru
      _
    // Predicated region
    $region26: #{tpu_custom_call.1} parent=1 // pred_check
      _
    $region27: #{tpu_custom_call.1} parent=1 // pred_check_branch
      %91 = sbr.rel (0) target = $region29
    $region28: #{tpu_custom_call.1} parent=1 // pred_region
      %93 = dma.done [#allocation4], 128
    $region29: #{tpu_custom_call.1} parent=1 // pred_fallthru
      _
    %94 = vsyncpa [#allocation3], 1
    %95 = vsyncpa [#allocation6], 1
    %96 = vsyncpa [#allocation4], 1

</llo_original>
